<compile_context>
chip_gen: v7x
topology: tpu7x:2x2x1
jax: 0.10.0
libtpu: 0.0.40
codegen_flags: <defaults>
</compile_context>

<pallas_src>
import functools

import jax
import jax.numpy as jnp
from jax.experimental import pallas as pl
from jax.experimental.pallas import tpu as pltpu


def _round_up(x: int, m: int) -> int:
    return ((x + m - 1) // m) * m


def _bce_with_weights_kernel(logits_ref, tgt_ref, out_ref, count_acc, nll_acc,
                             *, n_valid: int, tile_n: int):
    i = pl.program_id(0)

    @pl.when(i == 0)
    def _init():
        count_acc[...] = jnp.zeros_like(count_acc)
        nll_acc[...] = jnp.zeros_like(nll_acc)

    logits = logits_ref[...].astype(jnp.float32)           # (C, TN)
    tgt = tgt_ref[...]                                      # (1, TN) int32
    c, tn = logits.shape

    # Ragged-edge mask from the global column index: OOB columns of the last
    # tile (unspecified DMA contents) contribute nothing. No wrapper padding.
    col = jax.lax.broadcasted_iota(jnp.int32, (1, tn), 1)
    valid = (i * tile_n + col) < n_valid                    # (1, TN) bool

    class_ids = jax.lax.broadcasted_iota(jnp.int32, (c, tn), 0)
    onehot = ((class_ids == tgt) & valid).astype(jnp.float32)   # (C, TN)

    # Per-sample NLL without materializing logp: NLL = logsumexp(logits) - logit_target
    m = jnp.max(logits, axis=0, keepdims=True)                             # (1, TN)
    lse = jnp.log(jnp.sum(jnp.exp(logits - m), axis=0, keepdims=True))     # (1, TN)
    logit_t = jnp.sum(onehot * logits, axis=0, keepdims=True)              # (1, TN)
    nll = (m + lse) - logit_t                                              # (1, TN)
    # MUST mask before the onehot*nll multiply: garbage OOB logits can be Inf/NaN.
    nll = jnp.where(valid, nll, 0.0)

    # Per-class streaming accumulation (global counts needed before weights).
    count_acc[...] += jnp.sum(onehot, axis=1, keepdims=True)               # (C, 1)
    nll_acc[...] += jnp.sum(onehot * nll, axis=1, keepdims=True)           # (C, 1)

    @pl.when(i == pl.num_programs(0) - 1)
    def _finalize():
        counts = count_acc[...]                                            # (C, 1)
        # weight[c] = N / max(count_c, 1), then /= weight.sum(): both the uniform
        # N factor and the normalization cancel in num/den.
        w = 1.0 / jnp.maximum(counts, 1.0)
        num = jnp.sum(w * nll_acc[...], keepdims=True)                     # (1, 1)
        den = jnp.sum(w * counts, keepdims=True)                           # (1, 1)
        out_ref[...] = num / den


def bce_with_weights(logits, target, *, tile_n: int | None = None):
    """logits: (N, C) float (f32 or bf16), target: (N,) int -> scalar f32 loss."""
    n, c = logits.shape
    n_ceil = _round_up(n, 128)

    if tile_n is None:
        # VMEM-budgeted tile width: one input-tile set (f32 logits tile padded to
        # 8 sublanes + padded int32 target row) ~4 MiB; double-buffered this stays
        # far below the 32 MiB limit on all generations (v5e/v6e/v7x).
        c_pad = _round_up(c, 8)
        per_col_vmem = c_pad * 4 + 8 * 4
        tn = max(((4 << 20) // per_col_vmem) // 128 * 128, 1024)
        # Cap a single logits tile at ~8 MiB (large-C safety; see TODO above).
        tile_cap = max(((8 << 20) // (c_pad * 4)) // 128 * 128, 128)
        tn = min(tn, tile_cap)
    else:
        tn = _round_up(tile_n, 128)
    tn = max(min(tn, n_ceil), 128)
    grid = pl.cdiv(n, tn)

    # Lane-dense layout: class dim on sublanes, samples on lanes. The transpose /
    # reshape are fusible into the pallas_call input DMA via allow_input_fusion.
    logits_t = jnp.transpose(logits, (1, 0))                # (C, N)
    tgt_row = target.astype(jnp.int32).reshape(1, n)        # (1, N)

    kernel = functools.partial(_bce_with_weights_kernel, n_valid=n, tile_n=tn)

    cost = pl.CostEstimate(
        flops=8 * n * c,
        transcendentals=n * c + n,
        bytes_accessed=n * c * logits.dtype.itemsize + n * 4 + 4,
    )

    out = pl.pallas_call(
        kernel,
        out_shape=jax.ShapeDtypeStruct((1, 1), jnp.float32),
        grid_spec=pltpu.PrefetchScalarGridSpec(
            num_scalar_prefetch=0,
            grid=(grid,),
            in_specs=[
                pl.BlockSpec((c, tn), lambda i: (0, i)),
                pl.BlockSpec((1, tn), lambda i: (0, i)),
            ],
            out_specs=pl.BlockSpec((1, 1), lambda i: (0, 0)),
            scratch_shapes=[
                pltpu.VMEM((c, 1), jnp.float32),   # per-class counts
                pltpu.VMEM((c, 1), jnp.float32),   # per-class NLL sums
            ],
        ),
        compiler_params=pltpu.CompilerParams(
            dimension_semantics=("arbitrary",),
            vmem_limit_bytes=32 * 1024 * 1024,
            allow_input_fusion=[True, True],
        ),
        cost_estimate=cost,
    )(logits_t, tgt_row)
    return out[0, 0]


def _reference(logits, target):
    """Pure-JAX reference mirroring torch F.cross_entropy(weight=w, mean)."""
    n, c = logits.shape
    counts = jnp.sum(jax.nn.one_hot(target, c, dtype=jnp.float32), axis=0)
    weight = n / jnp.maximum(counts, 1.0)
    weight = weight / jnp.sum(weight)
    logp = jax.nn.log_softmax(logits.astype(jnp.float32), axis=1)
    nll = -jnp.take_along_axis(logp, target[:, None], axis=1)[:, 0]
    w = weight[target]
    return jnp.sum(w * nll) / jnp.sum(w)


if __name__ == "__main__":
    key = jax.random.PRNGKey(0)
    k1, k2, k3, k4 = jax.random.split(key, 4)

    # Small case (single ragged tile: exercises the in-kernel OOB mask).
    batch, num_class = 8, 4
    logits = jax.random.normal(k1, (batch, num_class), dtype=jnp.float32)
    target = jax.random.randint(k2, (batch,), 0, num_class, dtype=jnp.int32)
    loss = jax.block_until_ready(bce_with_weights(logits, target))
    ref = _reference(logits, target)
    assert jnp.allclose(loss, ref, rtol=1e-5, atol=1e-5), (loss, ref)

    # Multi-tile case: cross-tile per-class accumulation + ragged last tile.
    batch2 = 300
    logits2 = jax.random.normal(k3, (batch2, num_class), dtype=jnp.float32)
    target2 = jax.random.randint(k4, (batch2,), 0, num_class, dtype=jnp.int32)
    loss2 = jax.block_until_ready(bce_with_weights(logits2, target2, tile_n=128))
    ref2 = _reference(logits2, target2)
    assert jnp.allclose(loss2, ref2, rtol=1e-5, atol=1e-5), (loss2, ref2)

    # Auto-tile path (TN scaled with C) on the same data.
    loss3 = jax.block_until_ready(bce_with_weights(logits2, target2))
    assert jnp.allclose(loss3, ref2, rtol=1e-5, atol=1e-5), (loss3, ref2)

    print("KERNEL_OK")
</pallas_src>

<mosaic_0001>
module attributes {stable_mosaic.version = 11 : i64} {
  func.func @_bce_with_weights_kernel(%arg0: i32, %arg1: memref<4x128xf32, #tpu.memory_space<vmem>>, %arg2: memref<1x128xi32, #tpu.memory_space<vmem>>, %arg3: memref<1x1xf32, #tpu.memory_space<vmem>>, %arg4: memref<4x1xf32, #tpu.memory_space<vmem>>, %arg5: memref<4x1xf32, #tpu.memory_space<vmem>>) attributes {dimension_semantics = [#tpu.dimension_semantics<arbitrary>], iteration_bounds = array<i64: 1>, scalar_prefetch = 0 : i64, scratch_operands = 2 : i64, tpu.core_type = #tpu.core_type<tc>, window_params = [{transform_indices = @transform_0, window_bounds = array<i64: 4, 128>}, {transform_indices = @transform_1, window_bounds = array<i64: 1, 128>}, {pipeline_mode = #tpu.pipeline_mode<synchronous>, transform_indices = @transform_2, window_bounds = array<i64: 1, 1>}]} {
    %c0_i32 = arith.constant 0 : i32
    %0 = arith.cmpi eq, %arg0, %c0_i32 : i32
    %1 = arith.extui %0 : i1 to i32
    %c0_i32_0 = arith.constant 0 : i32
    %2 = arith.cmpi ne, %1, %c0_i32_0 : i32
    scf.if %2 {
      %cst_19 = arith.constant 0.000000e+00 : f32
      %48 = vector.broadcast %cst_19 : f32 to vector<4x1xf32>
      %c0_20 = arith.constant 0 : index
      %c0_21 = arith.constant 0 : index
      %49 = vector.load %arg4[%c0_20, %c0_21] : memref<4x1xf32, #tpu.memory_space<vmem>>, vector<4x1xf32>
      tpu.vector_store %arg4[%c0_20, %c0_21], %48 {strides = array<i32>} : memref<4x1xf32, #tpu.memory_space<vmem>>, vector<4x1xf32>,
      %cst_22 = arith.constant 0.000000e+00 : f32
      %50 = vector.broadcast %cst_22 : f32 to vector<4x1xf32>
      %c0_23 = arith.constant 0 : index
      %c0_24 = arith.constant 0 : index
      %51 = vector.load %arg5[%c0_23, %c0_24] : memref<4x1xf32, #tpu.memory_space<vmem>>, vector<4x1xf32>
      tpu.vector_store %arg5[%c0_23, %c0_24], %50 {strides = array<i32>} : memref<4x1xf32, #tpu.memory_space<vmem>>, vector<4x1xf32>,
    } else {
    }
    %c0 = arith.constant 0 : index
    %c0_1 = arith.constant 0 : index
    %3 = vector.load %arg1[%c0, %c0_1] : memref<4x128xf32, #tpu.memory_space<vmem>>, vector<4x128xf32>
    %c0_2 = arith.constant 0 : index
    %c0_3 = arith.constant 0 : index
    %4 = vector.load %arg2[%c0_2, %c0_3] : memref<1x128xi32, #tpu.memory_space<vmem>>, vector<1x128xi32>
    %5 = tpu.iota {dimensions = array<i32: 1>} : vector<1x128xi32>
    %c128_i32 = arith.constant 128 : i32
    %6 = arith.muli %arg0, %c128_i32 : i32
    %7 = vector.broadcast %6 : i32 to vector<1x128xi32>
    %8 = arith.addi %7, %5 : vector<1x128xi32>
    %c8_i32 = arith.constant 8 : i32
    %9 = vector.broadcast %c8_i32 : i32 to vector<1x128xi32>
    %10 = arith.cmpi slt, %8, %9 : vector<1x128xi32>
    %11 = tpu.iota {dimensions = array<i32: 0>} : vector<4x128xi32>
    %12 = vector.broadcast %4 : vector<1x128xi32> to vector<4x128xi32>
    %13 = arith.cmpi eq, %11, %12 : vector<4x128xi32>
    %14 = vector.broadcast %10 : vector<1x128xi1> to vector<4x128xi1>
    %15 = arith.andi %13, %14 : vector<4x128xi1>
    %16 = arith.extui %15 : vector<4x128xi1> to vector<4x128xi32>
    %17 = arith.sitofp %16 : vector<4x128xi32> to vector<4x128xf32>
    %cst = arith.constant dense<0xFF800000> : vector<128xf32>
    %18 = vector.multi_reduction <maximumf>, %3, %cst [0] : vector<4x128xf32> to vector<128xf32>
    %19 = vector.shape_cast %18 : vector<128xf32> to vector<1x128xf32>
    %20 = vector.broadcast %19 : vector<1x128xf32> to vector<4x128xf32>
    %21 = arith.subf %3, %20 : vector<4x128xf32>
    %22 = math.exp %21 : vector<4x128xf32>
    %cst_4 = arith.constant dense<0.000000e+00> : vector<128xf32>
    %23 = vector.multi_reduction <add>, %22, %cst_4 [0] : vector<4x128xf32> to vector<128xf32>
    %24 = vector.shape_cast %23 : vector<128xf32> to vector<1x128xf32>
    %25 = math.log %24 : vector<1x128xf32>
    %26 = arith.mulf %17, %3 : vector<4x128xf32>
    %cst_5 = arith.constant dense<0.000000e+00> : vector<128xf32>
    %27 = vector.multi_reduction <add>, %26, %cst_5 [0] : vector<4x128xf32> to vector<128xf32>
    %28 = vector.shape_cast %27 : vector<128xf32> to vector<1x128xf32>
    %29 = arith.addf %19, %25 : vector<1x128xf32>
    %30 = arith.subf %29, %28 : vector<1x128xf32>
    %cst_6 = arith.constant 0.000000e+00 : f32
    %31 = vector.broadcast %cst_6 : f32 to vector<1x128xf32>
    %32 = arith.select %10, %30, %31 : vector<1x128xi1>, vector<1x128xf32>
    %c0_7 = arith.constant 0 : index
    %c0_8 = arith.constant 0 : index
    %33 = vector.load %arg4[%c0_7, %c0_8] : memref<4x1xf32, #tpu.memory_space<vmem>>, vector<4x1xf32>
    %cst_9 = arith.constant dense<0.000000e+00> : vector<4xf32>
    %34 = vector.multi_reduction <add>, %17, %cst_9 [1] : vector<4x128xf32> to vector<4xf32>
    %35 = vector.shape_cast %34 : vector<4xf32> to vector<4x1xf32>
    %36 = arith.addf %33, %35 : vector<4x1xf32>
    %c0_10 = arith.constant 0 : index
    %c0_11 = arith.constant 0 : index
    %37 = vector.load %arg4[%c0_10, %c0_11] : memref<4x1xf32, #tpu.memory_space<vmem>>, vector<4x1xf32>
    tpu.vector_store %arg4[%c0_10, %c0_11], %36 {strides = array<i32>} : memref<4x1xf32, #tpu.memory_space<vmem>>, vector<4x1xf32>,
    %c0_12 = arith.constant 0 : index
    %c0_13 = arith.constant 0 : index
    %38 = vector.load %arg5[%c0_12, %c0_13] : memref<4x1xf32, #tpu.memory_space<vmem>>, vector<4x1xf32>
    %39 = vector.broadcast %32 : vector<1x128xf32> to vector<4x128xf32>
    %40 = arith.mulf %17, %39 : vector<4x128xf32>
    %cst_14 = arith.constant dense<0.000000e+00> : vector<4xf32>
    %41 = vector.multi_reduction <add>, %40, %cst_14 [1] : vector<4x128xf32> to vector<4xf32>
    %42 = vector.shape_cast %41 : vector<4xf32> to vector<4x1xf32>
    %43 = arith.addf %38, %42 : vector<4x1xf32>
    %c0_15 = arith.constant 0 : index
    %c0_16 = arith.constant 0 : index
    %44 = vector.load %arg5[%c0_15, %c0_16] : memref<4x1xf32, #tpu.memory_space<vmem>>, vector<4x1xf32>
    tpu.vector_store %arg5[%c0_15, %c0_16], %43 {strides = array<i32>} : memref<4x1xf32, #tpu.memory_space<vmem>>, vector<4x1xf32>,
    %c0_i32_17 = arith.constant 0 : i32
    %45 = arith.cmpi eq, %arg0, %c0_i32_17 : i32
    %46 = arith.extui %45 : i1 to i32
    %c0_i32_18 = arith.constant 0 : i32
    %47 = arith.cmpi ne, %46, %c0_i32_18 : i32
    scf.if %47 {
      %c0_19 = arith.constant 0 : index
      %c0_20 = arith.constant 0 : index
      %48 = vector.load %arg4[%c0_19, %c0_20] : memref<4x1xf32, #tpu.memory_space<vmem>>, vector<4x1xf32>
      %cst_21 = arith.constant 1.000000e+00 : f32
      %49 = vector.broadcast %cst_21 : f32 to vector<4x1xf32>
      %50 = arith.maximumf %48, %49 : vector<4x1xf32>
      %cst_22 = arith.constant 1.000000e+00 : f32
      %51 = vector.broadcast %cst_22 : f32 to vector<4x1xf32>
      %52 = arith.divf %51, %50 : vector<4x1xf32>
      %c0_23 = arith.constant 0 : index
      %c0_24 = arith.constant 0 : index
      %53 = vector.load %arg5[%c0_23, %c0_24] : memref<4x1xf32, #tpu.memory_space<vmem>>, vector<4x1xf32>
      %54 = arith.mulf %52, %53 : vector<4x1xf32>
      %55 = vector.shape_cast %54 : vector<4x1xf32> to vector<1x4x1xf32>
      %cst_25 = arith.constant dense<0.000000e+00> : vector<1xf32>
      %56 = vector.multi_reduction <add>, %55, %cst_25 [1, 2] : vector<1x4x1xf32> to vector<1xf32>
      %57 = vector.shape_cast %56 : vector<1xf32> to vector<1x1x1xf32>
      %58 = vector.extract %57[0, 0, 0] : f32 from vector<1x1x1xf32>
      %59 = vector.broadcast %58 : f32 to vector<1x1xf32>
      %60 = arith.mulf %52, %48 : vector<4x1xf32>
      %61 = vector.shape_cast %60 : vector<4x1xf32> to vector<1x4x1xf32>
      %cst_26 = arith.constant dense<0.000000e+00> : vector<1xf32>
      %62 = vector.multi_reduction <add>, %61, %cst_26 [1, 2] : vector<1x4x1xf32> to vector<1xf32>
      %63 = vector.shape_cast %62 : vector<1xf32> to vector<1x1x1xf32>
      %64 = vector.extract %63[0, 0, 0] : f32 from vector<1x1x1xf32>
      %65 = vector.broadcast %64 : f32 to vector<1x1xf32>
      %66 = arith.divf %59, %65 : vector<1x1xf32>
      %c0_27 = arith.constant 0 : index
      %c0_28 = arith.constant 0 : index
      %67 = vector.load %arg3[%c0_27, %c0_28] : memref<1x1xf32, #tpu.memory_space<vmem>>, vector<1x1xf32>
      tpu.vector_store %arg3[%c0_27, %c0_28], %66 {strides = array<i32>} : memref<1x1xf32, #tpu.memory_space<vmem>>, vector<1x1xf32>,
    } else {
    }
    return
  }
  func.func @transform_0(%arg0: i32) -> (i32, i32) {
    %c0_i32 = arith.constant 0 : i32
    %c0_i32_0 = arith.constant 0 : i32
    return %c0_i32, %arg0 : i32, i32
  }
  func.func @transform_1(%arg0: i32) -> (i32, i32) {
    %c0_i32 = arith.constant 0 : i32
    %c0_i32_0 = arith.constant 0 : i32
    return %c0_i32, %arg0 : i32, i32
  }
  func.func @transform_2(%arg0: i32) -> (i32, i32) {
    %c0_i32 = arith.constant 0 : i32
    %c0_i32_0 = arith.constant 0 : i32
    %c0_i32_1 = arith.constant 0 : i32
    return %c0_i32, %c0_i32_0 : i32, i32
  }
}

</mosaic_0001>

<llo_original>
// kernel: tpu_custom_call.1
$region0: #{tpu_custom_call.1}
  #allocation0 [shape = 'u32[]', space=smem, size = 0x4, offset = 0x4, fixed_abs, tag = 'smem constant byte address 0x4 - core index']
  #allocation1 [shape = 'u32[144,128]{1,0:T(1,128)}', space=vmem, size = 0x12000, scoped, tag = 'internal scratch']
  #allocation2 [shape = 'f32[4,1]{1,0:T(4,128)}', space=vmem, size = 0x800, scoped, tag = 'scratch operand']
  #allocation3 [shape = 'f32[4,1]{1,0:T(4,128)}', space=vmem, size = 0x800, scoped, tag = 'scratch operand']
  %s0 = inlined_call_operand.hbm [shape: f32[4,8], index: 0, kind: input, shape index: {}]
  %s1 = inlined_call_operand.vmem [shape: s32[1,8], index: 1, kind: input, shape index: {}]
  %s2 = inlined_call_operand.hbm [shape: f32[1,1], index: 2, kind: output, shape index: {}]
  %s3 = sld [smem:[#allocation0]]
  $region30: #{tpu_custom_call.1} parent=0
    _
  %s5 = ssub.s32 1, %s3
  %s6 = scalar_select 0, %s5, %s3
  $region1: #{tpu_custom_call.1} parent=0
    #allocation4 [shape = 'u8[2048]{0}', space=vmem, size = 0x800, scoped, tag = 'input window, operand 0, single buffered']
    #allocation5 [shape = 's32[1]{0}', space=sflag, size = 0x4, scoped, tag = 'scoped memory for tpu_custom_call.1']
    #allocation6 [shape = 's32[1]{0}', space=sflag, size = 0x4, scoped, tag = 'scoped memory for tpu_custom_call.1']
    #allocation7 [shape = 'u8[512]{0}', space=vmem, size = 0x400, scoped, tag = 'output window, operand 0, single buffered']
    %7 = vsyncpa [#allocation5], 0
    %8 = vsyncpa [#allocation6], 0
    // Predicated region
    $region2: #{tpu_custom_call.1} parent=1 // pred_check
      _
    $region3: #{tpu_custom_call.1} parent=1 // pred_check_branch
      %10 = sbr.rel (0) target = $region5
    $region4: #{tpu_custom_call.1} parent=1 // pred_region
      %s12 = ssub.s32 64, 64
      %13 = vsyncadd [#allocation5], %s12
      %s15 = sshll.u32 [#allocation4], 4
      %s16 = int_to_ptr.vmem [resolvable:$true] %s15
      %18 = dma.hbm_to_vmem [thread:$0]  %s0, 64, %s16, [#allocation5]
    $region5: #{tpu_custom_call.1} parent=1 // pred_fallthru
      _
    // Predicated region
    $region6: #{tpu_custom_call.1} parent=1 // pred_check
      _
    $region7: #{tpu_custom_call.1} parent=1 // pred_check_branch
      %20 = sbr.rel (0) target = $region9
    $region8: #{tpu_custom_call.1} parent=1 // pred_region
      _
    $region9: #{tpu_custom_call.1} parent=1 // pred_fallthru
      _
    // Predicated region
    $region10: #{tpu_custom_call.1} parent=1 // pred_check
      _
    $region11: #{tpu_custom_call.1} parent=1 // pred_check_branch
      %22 = sbr.rel (0) target = $region13
    $region12: #{tpu_custom_call.1} parent=1 // pred_region
      %23 = dma.done [#allocation5], 64
    $region13: #{tpu_custom_call.1} parent=1 // pred_fallthru
      _
    %p24 = scmp.eq.s32.totalorder 0, 0
    // Predicated region
    $region14: #{tpu_custom_call.1} parent=1 // pred_check
      %p25 = pneg %p24
    $region15: #{tpu_custom_call.1} parent=1 // pred_check_branch
      %27 = sbr.rel (%p25) target = $region17
    $region16: #{tpu_custom_call.1} parent=1 // pred_region
      %vm28 = vcmask 3072
      %29 = vst.msk [vmem:[#allocation2] sm:$0xf] %vm28, 0.0
      %30 = vst.msk [vmem:[#allocation3] sm:$0xf] %vm28, 0.0
    $region17: #{tpu_custom_call.1} parent=1 // pred_fallthru
      _
    %v31 = vld [vmem:[#allocation4] sm:$0xf]
    %v32 = vld [vmem:[%s1] sm:$0x1]
    %v33 = vlaneseq
    %v34 = vand.u32 %v33, 127
    %s35 = smul.u32 0, 128
    %v36 = vstv %s35
    %v37 = vadd.s32 %v36, %v34
    %vm38 = vcmp.lt.s32.totalorder %v37, 8
    %v39 = vlaneseq
    %v40 = vshrl.u32 %v39, 7
    %v41 = vlaneseq
    %v42 = vshrl.u32 %v41, 7
    %v43 = vsub.s32 0, %v42
    %v44 = vrot.slane %v32, %v43
    %vm45 = vcmp.eq.s32.totalorder %v40, %v44
    %v46 = vsel %vm38, 1, 0
    %vm47 = vcmp.eq.s32.totalorder %v46, 1
    %vm48 = vmand %vm45, %vm47
    %v49 = vsel %vm48, 1, 0
    %v50 = vcvt.s32.f32 %v49
    %vm51 = vcmask 1043456
    %v52 = vsel %vm51, %v31, -inf
    %v53 = vrot.slane %v52, 4
    %v54 = vmax.f32 %v52, %v53
    %v55 = vrot.slane %v54, 2
    %v56 = vmax.f32 %v54, %v55
    %v57 = vrot.slane %v56, 1
    %v58 = vmax.f32 %v56, %v57
    %v59 = vsub.f32 %v31, %v58
    %v60 = vmul.f32 %v59, 1.442695
    %v61 = vpow.pop %v60
    %v62 = vsel %vm51, %v61, 0.0
    %v63 = vrot.slane %v62, 4
    %v64 = vadd.f32 %v62, %v63
    %v65 = vrot.slane %v64, 2
    %v66 = vadd.f32 %v64, %v65
    %v67 = vrot.slane %v66, 1
    %v68 = vadd.f32 %v66, %v67
    %v69 = vlog2.pop %v68
    %v70 = vmul.f32 %v69, 0.6931472
    %v71 = vmul.f32 %v50, %v31
    %v72 = vsel %vm51, %v71, 0.0
    %v73 = vrot.slane %v72, 4
    %v74 = vadd.f32 %v72, %v73
    %v75 = vrot.slane %v74, 2
    %v76 = vadd.f32 %v74, %v75
    %v77 = vrot.slane %v76, 1
    %v78 = vadd.f32 %v76, %v77
    %v79 = vadd.f32 %v58, %v70
    %v80 = vsub.f32 %v79, %v78
    %v81 = vsel %vm38, %v80, 0.0
    %v82 = vld [vmem:[#allocation2] sm:$0xf]
    %v83 = vsel %vm51, %v50, 0.0
    %84 = vadd.xlane.f32.xlu0 %v83
    %v85 = vpop.xlane.xlu0 %84
    %v86 = vadd.f32 %v82, %v85
    %vm87 = vcmask 3072
    %88 = vst.msk [vmem:[#allocation2] sm:$0xf] %vm87, %v86
    %v89 = vld [vmem:[#allocation3] sm:$0xf]
    %v90 = vmul.f32 %v50, %v81
    %v91 = vsel %vm51, %v90, 0.0
    %92 = vadd.xlane.f32.xlu0 %v91
    %v93 = vpop.xlane.xlu0 %92
    %v94 = vadd.f32 %v89, %v93
    %95 = vst.msk [vmem:[#allocation3] sm:$0xf] %vm87, %v94
    // Predicated region
    $region18: #{tpu_custom_call.1} parent=1 // pred_check
      %p96 = pneg %p24
    $region19: #{tpu_custom_call.1} parent=1 // pred_check_branch
      %98 = sbr.rel (%p96) target = $region21
    $region20: #{tpu_custom_call.1} parent=1 // pred_region
      %v99 = vld [vmem:[#allocation2] sm:$0xf]
      %v100 = vmax.f32 %v99, 1.0
      %v101 = vrcp.pop %v100
      %v102 = vmul.f32 1.0, %v101
      %v103 = vld [vmem:[#allocation3] sm:$0xf]
      %v104 = vmul.f32 %v102, %v103
      %v105 = vsel %vm87, %v104, 0.0
      %106 = vadd.xlane.f32.xlu0 %v105
      %v107 = vpop.xlane.xlu0 %106
      %v108 = vrot.slane %v107, 4
      %v109 = vadd.f32 %v107, %v108
      %v110 = vrot.slane %v109, 2
      %v111 = vadd.f32 %v109, %v110
      %v112 = vrot.slane %v111, 1
      %v113 = vadd.f32 %v111, %v112
      %s114 = vtos %v113
      %v115 = vstv %s114
      %v116 = vmul.f32 %v102, %v99
      %v117 = vsel %vm87, %v116, 0.0
      %118 = vadd.xlane.f32.xlu0 %v117
      %v119 = vpop.xlane.xlu0 %118
      %v120 = vrot.slane %v119, 4
      %v121 = vadd.f32 %v119, %v120
      %v122 = vrot.slane %v121, 2
      %v123 = vadd.f32 %v121, %v122
      %v124 = vrot.slane %v123, 1
      %v125 = vadd.f32 %v123, %v124
      %s126 = vtos %v125
      %v127 = vstv %s126
      %v128 = vrcp.pop %v127
      %v129 = vmul.f32 %v115, %v128
      %vm130 = vcmask 0
      %131 = vst.msk [vmem:[#allocation7] sm:$0x1] %vm130, %v129
    $region21: #{tpu_custom_call.1} parent=1 // pred_fallthru
      _
    // Predicated region
    $region22: #{tpu_custom_call.1} parent=1 // pred_check
      _
    $region23: #{tpu_custom_call.1} parent=1 // pred_check_branch
      %133 = sbr.rel (0) target = $region25
    $region24: #{tpu_custom_call.1} parent=1 // pred_region
      %s135 = ssub.s32 16, 16
      %136 = vsyncadd [#allocation6], %s135
      %s138 = sshll.u32 [#allocation7], 4
      %s139 = int_to_ptr.vmem [resolvable:$true] %s138
      %141 = dma.vmem_to_hbm [thread:$0]  %s139, 16, %s2, [#allocation6]
    $region25: #{tpu_custom_call.1} parent=1 // pred_fallthru
      _
    // Predicated region
    $region26: #{tpu_custom_call.1} parent=1 // pred_check
      _
    $region27: #{tpu_custom_call.1} parent=1 // pred_check_branch
      %143 = sbr.rel (0) target = $region29
    $region28: #{tpu_custom_call.1} parent=1 // pred_region
      %144 = dma.done [#allocation6], 16
    $region29: #{tpu_custom_call.1} parent=1 // pred_fallthru
      _
    %145 = vsyncpa [#allocation5], 1
    %146 = vsyncpa [#allocation6], 1

</llo_original>
